<compile_context>
chip_gen: v7x
topology: tpu7x:2x2x1
jax: 0.10.0
libtpu: 0.0.40
codegen_flags: <defaults>
</compile_context>

<pallas_src>
import jax
import jax.numpy as jnp
from jax import lax
from jax.experimental import pallas as pl
from jax.experimental.pallas import tpu as pltpu

DIM_IN = 32      # input node feature dim
DIM_OUT = 1      # binary prediction
L = 2            # hidden layers -> dims 32 -> 16 -> 8 -> 1
N_NODES = 300    # total nodes across the batch
N_GRAPHS = 6     # number of graphs in the batch

OUT_PAD = 128    # lane-dense output block width (sliced back to DIM_OUT outside)
MAX_TILE_N = 512 # node-tile cap; multiple of 256 (v6e/v7x MXU) and of 8/128


def _make_kernel(n_nodes, tile_n, dim_in):
    """Build the kernel closure over the static node count / tile size."""

    def kernel(x_ref, ids_ref, w1_ref, b1_ref, w2_ref, b2_ref, w3_ref, b3_ref,
               out_ref, sum_acc):
        # ---- init the per-graph accumulator on the first node tile ----
        @pl.when(pl.program_id(0) == 0)
        def _():
            sum_acc[...] = jnp.zeros_like(sum_acc)

        # ---- mask the (possibly ragged / OOB) last tile ----
        # Rows >= n_nodes come from an out-of-bounds block read: unspecified HBM
        # garbage.  Select (not multiply) so NaN/Inf can never reach the MXU.
        row = (pl.program_id(0) * tile_n
               + lax.broadcasted_iota(jnp.int32, (tile_n, 1), 0))
        valid = row < n_nodes                                   # [tile_n, 1] bool
        x = jnp.where(valid, x_ref[...].astype(jnp.float32), 0.0)
        ones = valid.astype(jnp.float32)                        # masked ones column
        x_aug = jnp.concatenate([x, ones], axis=1)              # [tile_n, dim_in+1]

        # ---- segment-sum (features + counts) in a single MXU pass ----
        ids = ids_ref[...]                                      # [1, tile_n] int32
        b_pad = sum_acc.shape[0]
        graph_iota = lax.broadcasted_iota(jnp.int32, (b_pad, tile_n), 0)
        one_hot = (graph_iota == ids).astype(jnp.float32)       # [b_pad, tile_n]
        # Garbage ids in the ragged tile may match a real graph, but their x/ones
        # rows are zeroed above, so they contribute nothing to sums or counts.
        sum_acc[...] += jnp.dot(one_hot, x_aug,
                                preferred_element_type=jnp.float32)

        # ---- finalize on the last tile: mean + MLP head + lane-dense store ----
        @pl.when(pl.program_id(0) == pl.num_programs(0) - 1)
        def _():
            s = sum_acc[...]
            counts = jnp.maximum(s[:, dim_in:dim_in + 1], 1.0)  # folded count column
            pooled = s[:, :dim_in] * pl.reciprocal(counts)      # exact; runs once
            h = jnp.dot(pooled, w1_ref[...],
                        preferred_element_type=jnp.float32) + b1_ref[...]
            h = jnp.maximum(h, 0.0)
            h = jnp.dot(h, w2_ref[...],
                        preferred_element_type=jnp.float32) + b2_ref[...]
            h = jnp.maximum(h, 0.0)
            out = jnp.dot(h, w3_ref[...],
                          preferred_element_type=jnp.float32) + b3_ref[...]
            out_ref[...] = out.astype(out_ref.dtype)

    return kernel


def san_graph_head(x, batch_ids, params, n_graphs, *, max_tile_n=MAX_TILE_N):
    """x: [N, dim_in] f32; batch_ids: [N] int32 graph ids; returns [n_graphs, DIM_OUT]."""
    n_nodes, dim_in = x.shape

    # Single full tile when the whole node set fits (num_tiles == 1 for small
    # batches); otherwise stream MAX_TILE_N-row tiles with a masked ragged tail.
    tile_n = n_nodes if n_nodes <= max_tile_n else max_tile_n
    num_tiles = pl.cdiv(n_nodes, tile_n)

    b_pad = max(8, ((n_graphs + 7) // 8) * 8)            # graphs on sublanes

    # Only the tiny id vector is reshaped; x is consumed directly (no HBM copy).
    ids2d = batch_ids.astype(jnp.int32).reshape(1, n_nodes)

    w1, b1 = params["w1"], params["b1"]
    w2, b2 = params["w2"], params["b2"]
    w3, b3 = params["w3"], params["b3"]
    # Zero-pad the last layer to a lane-dense output width (128); tiny arrays.
    w3p = jnp.pad(w3, ((0, 0), (0, OUT_PAD - w3.shape[1])))
    b3p = jnp.pad(b3, ((0, 0), (0, OUT_PAD - b3.shape[1])))

    full = lambda arr: pl.BlockSpec(arr.shape, lambda n: (0, 0))

    flops = int(2 * n_nodes * b_pad * (dim_in + 1)
                + 2 * b_pad * (w1.size + w2.size + w3p.size))
    bytes_accessed = int(4 * (x.size + n_nodes
                              + w1.size + b1.size + w2.size + b2.size
                              + w3p.size + b3p.size
                              + b_pad * OUT_PAD))

    pred_full = pl.pallas_call(
        _make_kernel(n_nodes, tile_n, dim_in),
        out_shape=jax.ShapeDtypeStruct((b_pad, OUT_PAD), jnp.float32),
        grid_spec=pltpu.PrefetchScalarGridSpec(
            num_scalar_prefetch=0,
            grid=(num_tiles,),
            in_specs=[
                pl.BlockSpec((tile_n, dim_in), lambda n: (n, 0)),   # x node tiles
                pl.BlockSpec((1, tile_n), lambda n: (0, n)),        # graph ids per tile
                full(w1), full(b1), full(w2), full(b2), full(w3p), full(b3p),
            ],
            out_specs=pl.BlockSpec((b_pad, OUT_PAD), lambda n: (0, 0)),
            scratch_shapes=[
                pltpu.VMEM((b_pad, dim_in + 1), jnp.float32),  # sums + count column
            ],
        ),
        compiler_params=pltpu.CompilerParams(
            dimension_semantics=("arbitrary",),             # node axis is a reduction
            vmem_limit_bytes=32 * 1024 * 1024,              # safe on v5e/v6e/v7x
        ),
        cost_estimate=pl.CostEstimate(flops=flops, transcendentals=0,
                                      bytes_accessed=bytes_accessed),
    )(x, ids2d, w1, b1, w2, b2, w3p, b3p)

    return pred_full[:n_graphs, :DIM_OUT]


def init_params(key, dim_in, dim_out, L):
    """Deterministic synthetic init matching nn.Linear shapes (stored as [in, out])."""
    dims = [dim_in // (2 ** l) for l in range(L + 1)] + [dim_out]  # [32, 16, 8, 1]
    params = {}
    for i in range(L + 1):
        k_w, k_b, key = jax.random.split(key, 3)
        fan_in, fan_out = dims[i], dims[i + 1]
        bound = 1.0 / (fan_in ** 0.5)
        params[f"w{i+1}"] = jax.random.uniform(
            k_w, (fan_in, fan_out), jnp.float32, -bound, bound)
        params[f"b{i+1}"] = jax.random.uniform(
            k_b, (1, fan_out), jnp.float32, -bound, bound)
    return params


def reference(x, batch_ids, params, n_graphs):
    """Pure-JAX reference: exact f32 pooling + high-precision dots."""
    sums = jax.ops.segment_sum(x, batch_ids, num_segments=n_graphs)
    counts = jax.ops.segment_sum(jnp.ones((x.shape[0],), x.dtype), batch_ids,
                                 num_segments=n_graphs)
    h = sums / jnp.maximum(counts, 1.0)[:, None]
    hp = lax.Precision.HIGHEST
    h = jnp.maximum(jnp.dot(h, params["w1"], precision=hp) + params["b1"], 0.0)
    h = jnp.maximum(jnp.dot(h, params["w2"], precision=hp) + params["b2"], 0.0)
    return jnp.dot(h, params["w3"], precision=hp) + params["b3"]


if __name__ == "__main__":
    key = jax.random.PRNGKey(0)
    k_x, k_b, k_y, k_p = jax.random.split(key, 4)

    x = jax.random.normal(k_x, (N_NODES, DIM_IN), jnp.float32)
    batch_ids = jax.random.randint(k_b, (N_NODES,), 0, N_GRAPHS, dtype=jnp.int32)
    y = jax.random.bernoulli(k_y, 0.5, (N_GRAPHS, DIM_OUT)).astype(jnp.float32)

    params = init_params(k_p, DIM_IN, DIM_OUT, L)
    ref = reference(x, batch_ids, params, N_GRAPHS)

    # Single-tile path: 300 nodes <= MAX_TILE_N -> num_tiles == 1.
    pred = san_graph_head(x, batch_ids, params, N_GRAPHS)
    label = y  # _apply_index returns (batch.graph_feature, batch.y)
    pred = jax.block_until_ready(pred)
    assert pred.shape == (N_GRAPHS, DIM_OUT)
    # Tolerance accounts for MXU f32 multi-pass matmul vs exact-f32 reference.
    assert jnp.allclose(pred, ref, atol=1e-3, rtol=1e-3), (pred, ref)

    # Multi-tile path with a ragged last tile (exercises the in-kernel mask).
    pred2 = jax.block_until_ready(
        san_graph_head(x, batch_ids, params, N_GRAPHS, max_tile_n=128))
    assert jnp.allclose(pred2, ref, atol=1e-3, rtol=1e-3), (pred2, ref)

    print("KERNEL_OK")
</pallas_src>

<mosaic_0001>
module attributes {stable_mosaic.version = 11 : i64} {
  func.func @kernel(%arg0: i32, %arg1: memref<300x32xf32, #tpu.memory_space<vmem>>, %arg2: memref<1x300xi32, #tpu.memory_space<vmem>>, %arg3: memref<32x16xf32, #tpu.memory_space<vmem>>, %arg4: memref<1x16xf32, #tpu.memory_space<vmem>>, %arg5: memref<16x8xf32, #tpu.memory_space<vmem>>, %arg6: memref<1x8xf32, #tpu.memory_space<vmem>>, %arg7: memref<8x128xf32, #tpu.memory_space<vmem>>, %arg8: memref<1x128xf32, #tpu.memory_space<vmem>>, %arg9: memref<8x128xf32, #tpu.memory_space<vmem>>, %arg10: memref<8x33xf32, #tpu.memory_space<vmem>>) attributes {dimension_semantics = [#tpu.dimension_semantics<arbitrary>], iteration_bounds = array<i64: 1>, scalar_prefetch = 0 : i64, scratch_operands = 1 : i64, tpu.core_type = #tpu.core_type<tc>, window_params = [{transform_indices = @transform_0, window_bounds = array<i64: 300, 32>}, {transform_indices = @transform_1, window_bounds = array<i64: 1, 300>}, {pipeline_mode = #tpu.pipeline_mode<synchronous>, transform_indices = @transform_2, window_bounds = array<i64: 32, 16>}, {pipeline_mode = #tpu.pipeline_mode<synchronous>, transform_indices = @transform_3, window_bounds = array<i64: 1, 16>}, {pipeline_mode = #tpu.pipeline_mode<synchronous>, transform_indices = @transform_4, window_bounds = array<i64: 16, 8>}, {pipeline_mode = #tpu.pipeline_mode<synchronous>, transform_indices = @transform_5, window_bounds = array<i64: 1, 8>}, {pipeline_mode = #tpu.pipeline_mode<synchronous>, transform_indices = @transform_6, window_bounds = array<i64: 8, 128>}, {pipeline_mode = #tpu.pipeline_mode<synchronous>, transform_indices = @transform_7, window_bounds = array<i64: 1, 128>}, {pipeline_mode = #tpu.pipeline_mode<synchronous>, transform_indices = @transform_8, window_bounds = array<i64: 8, 128>}]} {
    %c0_i32 = arith.constant 0 : i32
    %0 = arith.cmpi eq, %arg0, %c0_i32 : i32
    %1 = arith.extui %0 : i1 to i32
    %c0_i32_0 = arith.constant 0 : i32
    %2 = arith.cmpi ne, %1, %c0_i32_0 : i32
    scf.if %2 {
      %cst_12 = arith.constant 0.000000e+00 : f32
      %30 = vector.broadcast %cst_12 : f32 to vector<8x33xf32>
      %c0_13 = arith.constant 0 : index
      %c0_14 = arith.constant 0 : index
      %31 = vector.load %arg10[%c0_13, %c0_14] : memref<8x33xf32, #tpu.memory_space<vmem>>, vector<8x33xf32>
      tpu.vector_store %arg10[%c0_13, %c0_14], %30 {strides = array<i32>} : memref<8x33xf32, #tpu.memory_space<vmem>>, vector<8x33xf32>,
    } else {
    }
    %c300_i32 = arith.constant 300 : i32
    %3 = arith.muli %arg0, %c300_i32 : i32
    %4 = tpu.iota {dimensions = array<i32: 0>} : vector<300x1xi32>
    %5 = vector.broadcast %3 : i32 to vector<300x1xi32>
    %6 = arith.addi %5, %4 : vector<300x1xi32>
    %c300_i32_1 = arith.constant 300 : i32
    %7 = vector.broadcast %c300_i32_1 : i32 to vector<300x1xi32>
    %8 = arith.cmpi slt, %6, %7 : vector<300x1xi32>
    %c0 = arith.constant 0 : index
    %c0_2 = arith.constant 0 : index
    %9 = vector.load %arg1[%c0, %c0_2] : memref<300x32xf32, #tpu.memory_space<vmem>>, vector<300x32xf32>
    %cst = arith.constant 0.000000e+00 : f32
    %10 = vector.shape_cast %8 : vector<300x1xi1> to vector<300x1xi1>
    %11 = vector.broadcast %10 : vector<300x1xi1> to vector<300x32xi1>
    %12 = vector.broadcast %cst : f32 to vector<300x32xf32>
    %13 = arith.select %11, %9, %12 : vector<300x32xi1>, vector<300x32xf32>
    %14 = arith.extui %8 : vector<300x1xi1> to vector<300x1xi32>
    %15 = arith.sitofp %14 : vector<300x1xi32> to vector<300x1xf32>
    %16 = tpu.concatenate %13, %15 in 1 : vector<300x32xf32>, vector<300x1xf32> -> vector<300x33xf32>
    %c0_3 = arith.constant 0 : index
    %c0_4 = arith.constant 0 : index
    %17 = vector.load %arg2[%c0_3, %c0_4] : memref<1x300xi32, #tpu.memory_space<vmem>>, vector<1x300xi32>
    %18 = tpu.iota {dimensions = array<i32: 0>} : vector<8x300xi32>
    %19 = vector.broadcast %17 : vector<1x300xi32> to vector<8x300xi32>
    %20 = arith.cmpi eq, %18, %19 : vector<8x300xi32>
    %21 = arith.extui %20 : vector<8x300xi1> to vector<8x300xi32>
    %22 = arith.sitofp %21 : vector<8x300xi32> to vector<8x300xf32>
    %c0_5 = arith.constant 0 : index
    %c0_6 = arith.constant 0 : index
    %23 = vector.load %arg10[%c0_5, %c0_6] : memref<8x33xf32, #tpu.memory_space<vmem>>, vector<8x33xf32>
    %cst_7 = arith.constant dense<0.000000e+00> : vector<8x33xf32>
    %24 = tpu.matmul %22, %16, %cst_7 {dimension_numbers = #tpu.dot_dimension_numbers<[1], [0], [0], [1], [0, 0, 1, 1], [], []>} : vector<8x300xf32>, vector<300x33xf32>, vector<8x33xf32> -> vector<8x33xf32>
    %25 = arith.addf %23, %24 : vector<8x33xf32>
    %c0_8 = arith.constant 0 : index
    %c0_9 = arith.constant 0 : index
    %26 = vector.load %arg10[%c0_8, %c0_9] : memref<8x33xf32, #tpu.memory_space<vmem>>, vector<8x33xf32>
    tpu.vector_store %arg10[%c0_8, %c0_9], %25 {strides = array<i32>} : memref<8x33xf32, #tpu.memory_space<vmem>>, vector<8x33xf32>,
    %c0_i32_10 = arith.constant 0 : i32
    %27 = arith.cmpi eq, %arg0, %c0_i32_10 : i32
    %28 = arith.extui %27 : i1 to i32
    %c0_i32_11 = arith.constant 0 : i32
    %29 = arith.cmpi ne, %28, %c0_i32_11 : i32
    scf.if %29 {
      %c0_12 = arith.constant 0 : index
      %c0_13 = arith.constant 0 : index
      %30 = vector.load %arg10[%c0_12, %c0_13] : memref<8x33xf32, #tpu.memory_space<vmem>>, vector<8x33xf32>
      %31 = vector.extract_strided_slice %30 {offsets = [0, 32], sizes = [8, 1], strides = [1, 1]} : vector<8x33xf32> to vector<8x1xf32>
      %cst_14 = arith.constant 1.000000e+00 : f32
      %32 = vector.broadcast %cst_14 : f32 to vector<8x1xf32>
      %33 = arith.maximumf %31, %32 : vector<8x1xf32>
      %34 = vector.extract_strided_slice %30 {offsets = [0, 0], sizes = [8, 32], strides = [1, 1]} : vector<8x33xf32> to vector<8x32xf32>
      %35 = tpu.reciprocal %33 : vector<8x1xf32> -> vector<8x1xf32>
      %36 = vector.broadcast %35 : vector<8x1xf32> to vector<8x32xf32>
      %37 = arith.mulf %34, %36 : vector<8x32xf32>
      %c0_15 = arith.constant 0 : index
      %c0_16 = arith.constant 0 : index
      %38 = vector.load %arg3[%c0_15, %c0_16] : memref<32x16xf32, #tpu.memory_space<vmem>>, vector<32x16xf32>
      %cst_17 = arith.constant dense<0.000000e+00> : vector<8x16xf32>
      %39 = tpu.matmul %37, %38, %cst_17 {dimension_numbers = #tpu.dot_dimension_numbers<[1], [0], [0], [1], [0, 0, 1, 1], [], []>} : vector<8x32xf32>, vector<32x16xf32>, vector<8x16xf32> -> vector<8x16xf32>
      %c0_18 = arith.constant 0 : index
      %c0_19 = arith.constant 0 : index
      %40 = vector.load %arg4[%c0_18, %c0_19] : memref<1x16xf32, #tpu.memory_space<vmem>>, vector<1x16xf32>
      %41 = vector.broadcast %40 : vector<1x16xf32> to vector<8x16xf32>
      %42 = arith.addf %39, %41 : vector<8x16xf32>
      %cst_20 = arith.constant 0.000000e+00 : f32
      %43 = vector.broadcast %cst_20 : f32 to vector<8x16xf32>
      %44 = arith.maximumf %42, %43 : vector<8x16xf32>
      %c0_21 = arith.constant 0 : index
      %c0_22 = arith.constant 0 : index
      %45 = vector.load %arg5[%c0_21, %c0_22] : memref<16x8xf32, #tpu.memory_space<vmem>>, vector<16x8xf32>
      %cst_23 = arith.constant dense<0.000000e+00> : vector<8x8xf32>
      %46 = tpu.matmul %44, %45, %cst_23 {dimension_numbers = #tpu.dot_dimension_numbers<[1], [0], [0], [1], [0, 0, 1, 1], [], []>} : vector<8x16xf32>, vector<16x8xf32>, vector<8x8xf32> -> vector<8x8xf32>
      %c0_24 = arith.constant 0 : index
      %c0_25 = arith.constant 0 : index
      %47 = vector.load %arg6[%c0_24, %c0_25] : memref<1x8xf32, #tpu.memory_space<vmem>>, vector<1x8xf32>
      %48 = vector.broadcast %47 : vector<1x8xf32> to vector<8x8xf32>
      %49 = arith.addf %46, %48 : vector<8x8xf32>
      %cst_26 = arith.constant 0.000000e+00 : f32
      %50 = vector.broadcast %cst_26 : f32 to vector<8x8xf32>
      %51 = arith.maximumf %49, %50 : vector<8x8xf32>
      %c0_27 = arith.constant 0 : index
      %c0_28 = arith.constant 0 : index
      %52 = vector.load %arg7[%c0_27, %c0_28] : memref<8x128xf32, #tpu.memory_space<vmem>>, vector<8x128xf32>
      %cst_29 = arith.constant dense<0.000000e+00> : vector<8x128xf32>
      %53 = tpu.matmul %51, %52, %cst_29 {dimension_numbers = #tpu.dot_dimension_numbers<[1], [0], [0], [1], [0, 0, 1, 1], [], []>} : vector<8x8xf32>, vector<8x128xf32>, vector<8x128xf32> -> vector<8x128xf32>
      %c0_30 = arith.constant 0 : index
      %c0_31 = arith.constant 0 : index
      %54 = vector.load %arg8[%c0_30, %c0_31] : memref<1x128xf32, #tpu.memory_space<vmem>>, vector<1x128xf32>
      %55 = vector.broadcast %54 : vector<1x128xf32> to vector<8x128xf32>
      %56 = arith.addf %53, %55 : vector<8x128xf32>
      %c0_32 = arith.constant 0 : index
      %c0_33 = arith.constant 0 : index
      %57 = vector.load %arg9[%c0_32, %c0_33] : memref<8x128xf32, #tpu.memory_space<vmem>>, vector<8x128xf32>
      tpu.vector_store %arg9[%c0_32, %c0_33], %56 {strides = array<i32>} : memref<8x128xf32, #tpu.memory_space<vmem>>, vector<8x128xf32>,
    } else {
    }
    return
  }
  func.func @transform_0(%arg0: i32) -> (i32, i32) {
    %c0_i32 = arith.constant 0 : i32
    %c0_i32_0 = arith.constant 0 : i32
    return %arg0, %c0_i32 : i32, i32
  }
  func.func @transform_1(%arg0: i32) -> (i32, i32) {
    %c0_i32 = arith.constant 0 : i32
    %c0_i32_0 = arith.constant 0 : i32
    return %c0_i32, %arg0 : i32, i32
  }
  func.func @transform_2(%arg0: i32) -> (i32, i32) {
    %c0_i32 = arith.constant 0 : i32
    %c0_i32_0 = arith.constant 0 : i32
    %c0_i32_1 = arith.constant 0 : i32
    return %c0_i32, %c0_i32_0 : i32, i32
  }
  func.func @transform_3(%arg0: i32) -> (i32, i32) {
    %c0_i32 = arith.constant 0 : i32
    %c0_i32_0 = arith.constant 0 : i32
    %c0_i32_1 = arith.constant 0 : i32
    return %c0_i32, %c0_i32_0 : i32, i32
  }
  func.func @transform_4(%arg0: i32) -> (i32, i32) {
    %c0_i32 = arith.constant 0 : i32
    %c0_i32_0 = arith.constant 0 : i32
    %c0_i32_1 = arith.constant 0 : i32
    return %c0_i32, %c0_i32_0 : i32, i32
  }
  func.func @transform_5(%arg0: i32) -> (i32, i32) {
    %c0_i32 = arith.constant 0 : i32
    %c0_i32_0 = arith.constant 0 : i32
    %c0_i32_1 = arith.constant 0 : i32
    return %c0_i32, %c0_i32_0 : i32, i32
  }
  func.func @transform_6(%arg0: i32) -> (i32, i32) {
    %c0_i32 = arith.constant 0 : i32
    %c0_i32_0 = arith.constant 0 : i32
    %c0_i32_1 = arith.constant 0 : i32
    return %c0_i32, %c0_i32_0 : i32, i32
  }
  func.func @transform_7(%arg0: i32) -> (i32, i32) {
    %c0_i32 = arith.constant 0 : i32
    %c0_i32_0 = arith.constant 0 : i32
    %c0_i32_1 = arith.constant 0 : i32
    return %c0_i32, %c0_i32_0 : i32, i32
  }
  func.func @transform_8(%arg0: i32) -> (i32, i32) {
    %c0_i32 = arith.constant 0 : i32
    %c0_i32_0 = arith.constant 0 : i32
    %c0_i32_1 = arith.constant 0 : i32
    return %c0_i32, %c0_i32_0 : i32, i32
  }
}

</mosaic_0001>

<llo_original>
// kernel: tpu_custom_call.1
$region0: #{tpu_custom_call.1}
  #allocation0 [shape = 'u32[]', space=smem, size = 0x4, offset = 0x4, fixed_abs, tag = 'smem constant byte address 0x4 - core index']
  #allocation1 [shape = 'u32[144,128]{1,0:T(1,128)}', space=vmem, size = 0x12000, scoped, tag = 'internal scratch']
  #allocation2 [shape = 'f32[8,33]{1,0:T(8,128)}', space=vmem, size = 0x1000, scoped, tag = 'scratch operand']
  %s0 = inlined_call_operand.vmem [shape: f32[300,32], index: 0, kind: input, shape index: {}]
  %s1 = inlined_call_operand.vmem [shape: s32[1,300], index: 1, kind: input, shape index: {}]
  %s2 = inlined_call_operand.vmem [shape: f32[32,16], index: 2, kind: input, shape index: {}]
  %s3 = inlined_call_operand.vmem [shape: f32[1,16], index: 3, kind: input, shape index: {}]
  %s4 = inlined_call_operand.vmem [shape: f32[16,8], index: 4, kind: input, shape index: {}]
  %s5 = inlined_call_operand.vmem [shape: f32[1,8], index: 5, kind: input, shape index: {}]
  %s6 = inlined_call_operand.vmem [shape: f32[8,128], index: 6, kind: input, shape index: {}]
  %s7 = inlined_call_operand.vmem [shape: f32[1,128], index: 7, kind: input, shape index: {}]
  %s8 = inlined_call_operand.hbm [shape: f32[8,128], index: 8, kind: output, shape index: {}]
  %s9 = sld [smem:[#allocation0]]
  $region50: #{tpu_custom_call.1} parent=0
    _
  %s11 = ssub.s32 1, %s9
  %s12 = scalar_select 0, %s11, %s9
  $region1: #{tpu_custom_call.1} parent=0
    #allocation3 [shape = 'u8[4096]{0}', space=vmem, size = 0x1000, scoped, tag = 'output window, operand 0, single buffered']
    #allocation4 [shape = 's32[1]{0}', space=sflag, size = 0x4, scoped, tag = 'scoped memory for tpu_custom_call.1']
    %13 = vsyncpa [#allocation4], 0
    // Predicated region
    $region2: #{tpu_custom_call.1} parent=1 // pred_check
      _
    $region3: #{tpu_custom_call.1} parent=1 // pred_check_branch
      %15 = sbr.rel (0) target = $region5
    $region4: #{tpu_custom_call.1} parent=1 // pred_region
      _
    $region5: #{tpu_custom_call.1} parent=1 // pred_fallthru
      _
    // Predicated region
    $region6: #{tpu_custom_call.1} parent=1 // pred_check
      _
    $region7: #{tpu_custom_call.1} parent=1 // pred_check_branch
      %17 = sbr.rel (0) target = $region9
    $region8: #{tpu_custom_call.1} parent=1 // pred_region
      _
    $region9: #{tpu_custom_call.1} parent=1 // pred_fallthru
      _
    // Predicated region
    $region10: #{tpu_custom_call.1} parent=1 // pred_check
      _
    $region11: #{tpu_custom_call.1} parent=1 // pred_check_branch
      %19 = sbr.rel (0) target = $region13
    $region12: #{tpu_custom_call.1} parent=1 // pred_region
      _
    $region13: #{tpu_custom_call.1} parent=1 // pred_fallthru
      _
    // Predicated region
    $region14: #{tpu_custom_call.1} parent=1 // pred_check
      _
    $region15: #{tpu_custom_call.1} parent=1 // pred_check_branch
      %21 = sbr.rel (0) target = $region17
    $region16: #{tpu_custom_call.1} parent=1 // pred_region
      _
    $region17: #{tpu_custom_call.1} parent=1 // pred_fallthru
      _
    // Predicated region
    $region18: #{tpu_custom_call.1} parent=1 // pred_check
      _
    $region19: #{tpu_custom_call.1} parent=1 // pred_check_branch
      %23 = sbr.rel (0) target = $region21
    $region20: #{tpu_custom_call.1} parent=1 // pred_region
      _
    $region21: #{tpu_custom_call.1} parent=1 // pred_fallthru
      _
    // Predicated region
    $region22: #{tpu_custom_call.1} parent=1 // pred_check
      _
    $region23: #{tpu_custom_call.1} parent=1 // pred_check_branch
      %25 = sbr.rel (0) target = $region25
    $region24: #{tpu_custom_call.1} parent=1 // pred_region
      _
    $region25: #{tpu_custom_call.1} parent=1 // pred_fallthru
      _
    // Predicated region
    $region26: #{tpu_custom_call.1} parent=1 // pred_check
      _
    $region27: #{tpu_custom_call.1} parent=1 // pred_check_branch
      %27 = sbr.rel (0) target = $region29
    $region28: #{tpu_custom_call.1} parent=1 // pred_region
      _
    $region29: #{tpu_custom_call.1} parent=1 // pred_fallthru
      _
    // Predicated region
    $region30: #{tpu_custom_call.1} parent=1 // pred_check
      _
    $region31: #{tpu_custom_call.1} parent=1 // pred_check_branch
      %29 = sbr.rel (0) target = $region33
    $region32: #{tpu_custom_call.1} parent=1 // pred_region
      _
    $region33: #{tpu_custom_call.1} parent=1 // pred_fallthru
      _
    %p30 = scmp.eq.s32.totalorder 0, 0
    // Predicated region
    $region34: #{tpu_custom_call.1} parent=1 // pred_check
      %p31 = pneg %p30
    $region35: #{tpu_custom_call.1} parent=1 // pred_check_branch
      %33 = sbr.rel (%p31) target = $region37
    $region36: #{tpu_custom_call.1} parent=1 // pred_region
      %vm34 = vcmask 269312
      %35 = vst.msk [vmem:[#allocation2] sm:$0xff] %vm34, 0.0
    $region37: #{tpu_custom_call.1} parent=1 // pred_fallthru
      _
    %s36 = smul.u32 0, 300
    %v37 = vlaneseq
    %v38 = vshrl.u32 %v37, 7
    %v39 = vadd.s32 %v38, 8
    %v40 = vadd.s32 %v38, 16
    %v41 = vadd.s32 %v38, 24
    %v42 = vadd.s32 %v38, 32
    %v43 = vadd.s32 %v38, 40
    %v44 = vadd.s32 %v38, 48
    %v45 = vadd.s32 %v38, 56
    %v46 = vadd.s32 %v38, 64
    %v47 = vadd.s32 %v38, 72
    %v48 = vadd.s32 %v38, 80
    %v49 = vadd.s32 %v38, 88
    %v50 = vadd.s32 %v38, 96
    %v51 = vadd.s32 %v38, 104
    %v52 = vadd.s32 %v38, 112
    %v53 = vadd.s32 %v38, 120
    %v54 = vadd.s32 %v38, 128
    %v55 = vadd.s32 %v38, 136
    %v56 = vadd.s32 %v38, 144
    %v57 = vadd.s32 %v38, 152
    %v58 = vadd.s32 %v38, 160
    %v59 = vadd.s32 %v38, 168
    %v60 = vadd.s32 %v38, 176
    %v61 = vadd.s32 %v38, 184
    %v62 = vadd.s32 %v38, 192
    %v63 = vadd.s32 %v38, 200
    %v64 = vadd.s32 %v38, 208
    %v65 = vadd.s32 %v38, 216
    %v66 = vadd.s32 %v38, 224
    %v67 = vadd.s32 %v38, 232
    %v68 = vadd.s32 %v38, 240
    %v69 = vadd.s32 %v38, 248
    %v70 = vadd.s32 %v38, 256
    %v71 = vadd.s32 %v38, 264
    %v72 = vadd.s32 %v38, 272
    %v73 = vadd.s32 %v38, 280
    %v74 = vadd.s32 %v38, 288
    %v75 = vadd.s32 %v38, 296
    %v76 = vstv %s36
    %v77 = vadd.s32 %v76, %v38
    %v78 = vadd.s32 %v76, %v39
    %v79 = vadd.s32 %v76, %v40
    %v80 = vadd.s32 %v76, %v41
    %v81 = vadd.s32 %v76, %v42
    %v82 = vadd.s32 %v76, %v43
    %v83 = vadd.s32 %v76, %v44
    %v84 = vadd.s32 %v76, %v45
    %v85 = vadd.s32 %v76, %v46
    %v86 = vadd.s32 %v76, %v47
    %v87 = vadd.s32 %v76, %v48
    %v88 = vadd.s32 %v76, %v49
    %v89 = vadd.s32 %v76, %v50
    %v90 = vadd.s32 %v76, %v51
    %v91 = vadd.s32 %v76, %v52
    %v92 = vadd.s32 %v76, %v53
    %v93 = vadd.s32 %v76, %v54
    %v94 = vadd.s32 %v76, %v55
    %v95 = vadd.s32 %v76, %v56
    %v96 = vadd.s32 %v76, %v57
    %v97 = vadd.s32 %v76, %v58
    %v98 = vadd.s32 %v76, %v59
    %v99 = vadd.s32 %v76, %v60
    %v100 = vadd.s32 %v76, %v61
    %v101 = vadd.s32 %v76, %v62
    %v102 = vadd.s32 %v76, %v63
    %v103 = vadd.s32 %v76, %v64
    %v104 = vadd.s32 %v76, %v65
    %v105 = vadd.s32 %v76, %v66
    %v106 = vadd.s32 %v76, %v67
    %v107 = vadd.s32 %v76, %v68
    %v108 = vadd.s32 %v76, %v69
    %v109 = vadd.s32 %v76, %v70
    %v110 = vadd.s32 %v76, %v71
    %v111 = vadd.s32 %v76, %v72
    %v112 = vadd.s32 %v76, %v73
    %v113 = vadd.s32 %v76, %v74
    %v114 = vadd.s32 %v76, %v75
    %vm115 = vcmp.lt.s32.totalorder %v77, 300
    %vm116 = vcmp.lt.s32.totalorder %v78, 300
    %vm117 = vcmp.lt.s32.totalorder %v79, 300
    %vm118 = vcmp.lt.s32.totalorder %v80, 300
    %vm119 = vcmp.lt.s32.totalorder %v81, 300
    %vm120 = vcmp.lt.s32.totalorder %v82, 300
    %vm121 = vcmp.lt.s32.totalorder %v83, 300
    %vm122 = vcmp.lt.s32.totalorder %v84, 300
    %vm123 = vcmp.lt.s32.totalorder %v85, 300
    %vm124 = vcmp.lt.s32.totalorder %v86, 300
    %vm125 = vcmp.lt.s32.totalorder %v87, 300
    %vm126 = vcmp.lt.s32.totalorder %v88, 300
    %vm127 = vcmp.lt.s32.totalorder %v89, 300
    %vm128 = vcmp.lt.s32.totalorder %v90, 300
    %vm129 = vcmp.lt.s32.totalorder %v91, 300
    %vm130 = vcmp.lt.s32.totalorder %v92, 300
    %vm131 = vcmp.lt.s32.totalorder %v93, 300
    %vm132 = vcmp.lt.s32.totalorder %v94, 300
    %vm133 = vcmp.lt.s32.totalorder %v95, 300
    %vm134 = vcmp.lt.s32.totalorder %v96, 300
    %vm135 = vcmp.lt.s32.totalorder %v97, 300
    %vm136 = vcmp.lt.s32.totalorder %v98, 300
    %vm137 = vcmp.lt.s32.totalorder %v99, 300
    %vm138 = vcmp.lt.s32.totalorder %v100, 300
    %vm139 = vcmp.lt.s32.totalorder %v101, 300
    %vm140 = vcmp.lt.s32.totalorder %v102, 300
    %vm141 = vcmp.lt.s32.totalorder %v103, 300
    %vm142 = vcmp.lt.s32.totalorder %v104, 300
    %vm143 = vcmp.lt.s32.totalorder %v105, 300
    %vm144 = vcmp.lt.s32.totalorder %v106, 300
    %vm145 = vcmp.lt.s32.totalorder %v107, 300
    %vm146 = vcmp.lt.s32.totalorder %v108, 300
    %vm147 = vcmp.lt.s32.totalorder %v109, 300
    %vm148 = vcmp.lt.s32.totalorder %v110, 300
    %vm149 = vcmp.lt.s32.totalorder %v111, 300
    %vm150 = vcmp.lt.s32.totalorder %v112, 300
    %vm151 = vcmp.lt.s32.totalorder %v113, 300
    %vm152 = vcmp.lt.s32.totalorder %v114, 300
    %v153 = vld [vmem:[%s0] sm:$0xff]
    %v154 = vld [vmem:[%s0 + $0x8] sm:$0xff]
    %v155 = vld [vmem:[%s0 + $0x10] sm:$0xff]
    %v156 = vld [vmem:[%s0 + $0x18] sm:$0xff]
    %v157 = vld [vmem:[%s0 + $0x20] sm:$0xff]
    %v158 = vld [vmem:[%s0 + $0x28] sm:$0xff]
    %v159 = vld [vmem:[%s0 + $0x30] sm:$0xff]
    %v160 = vld [vmem:[%s0 + $0x38] sm:$0xff]
    %v161 = vld [vmem:[%s0 + $0x40] sm:$0xff]
    %v162 = vld [vmem:[%s0 + $0x48] sm:$0xff]
    %v163 = vld [vmem:[%s0 + $0x50] sm:$0xff]
    %v164 = vld [vmem:[%s0 + $0x58] sm:$0xff]
    %v165 = vld [vmem:[%s0 + $0x60] sm:$0xff]
    %v166 = vld [vmem:[%s0 + $0x68] sm:$0xff]
    %v167 = vld [vmem:[%s0 + $0x70] sm:$0xff]
    %v168 = vld [vmem:[%s0 + $0x78] sm:$0xff]
    %v169 = vld [vmem:[%s0 + $0x80] sm:$0xff]
    %v170 = vld [vmem:[%s0 + $0x88] sm:$0xff]
    %v171 = vld [vmem:[%s0 + $0x90] sm:$0xff]
    %v172 = vld [vmem:[%s0 + $0x98] sm:$0xff]
    %v173 = vld [vmem:[%s0 + $0xa0] sm:$0xff]
    %v174 = vld [vmem:[%s0 + $0xa8] sm:$0xff]
    %v175 = vld [vmem:[%s0 + $0xb0] sm:$0xff]
    %v176 = vld [vmem:[%s0 + $0xb8] sm:$0xff]
    %v177 = vld [vmem:[%s0 + $0xc0] sm:$0xff]
    %v178 = vld [vmem:[%s0 + $0xc8] sm:$0xff]
    %v179 = vld [vmem:[%s0 + $0xd0] sm:$0xff]
    %v180 = vld [vmem:[%s0 + $0xd8] sm:$0xff]
    %v181 = vld [vmem:[%s0 + $0xe0] sm:$0xff]
    %v182 = vld [vmem:[%s0 + $0xe8] sm:$0xff]
    %v183 = vld [vmem:[%s0 + $0xf0] sm:$0xff]
    %v184 = vld [vmem:[%s0 + $0xf8] sm:$0xff]
    %v185 = vld [vmem:[%s0 + $0x100] sm:$0xff]
    %v186 = vld [vmem:[%s0 + $0x108] sm:$0xff]
    %v187 = vld [vmem:[%s0 + $0x110] sm:$0xff]
    %v188 = vld [vmem:[%s0 + $0x118] sm:$0xff]
    %v189 = vld [vmem:[%s0 + $0x120] sm:$0xff]
    %v190 = vld [vmem:[%s0 + $0x128] sm:$0xf]
    %v191 = vsel %vm115, 1, 0
    %v192 = vsel %vm116, 1, 0
    %v193 = vsel %vm117, 1, 0
    %v194 = vsel %vm118, 1, 0
    %v195 = vsel %vm119, 1, 0
    %v196 = vsel %vm120, 1, 0
    %v197 = vsel %vm121, 1, 0
    %v198 = vsel %vm122, 1, 0
    %v199 = vsel %vm123, 1, 0
    %v200 = vsel %vm124, 1, 0
    %v201 = vsel %vm125, 1, 0
    %v202 = vsel %vm126, 1, 0
    %v203 = vsel %vm127, 1, 0
    %v204 = vsel %vm128, 1, 0
    %v205 = vsel %vm129, 1, 0
    %v206 = vsel %vm130, 1, 0
    %v207 = vsel %vm131, 1, 0
    %v208 = vsel %vm132, 1, 0
    %v209 = vsel %vm133, 1, 0
    %v210 = vsel %vm134, 1, 0
    %v211 = vsel %vm135, 1, 0
    %v212 = vsel %vm136, 1, 0
    %v213 = vsel %vm137, 1, 0
    %v214 = vsel %vm138, 1, 0
    %v215 = vsel %vm139, 1, 0
    %v216 = vsel %vm140, 1, 0
    %v217 = vsel %vm141, 1, 0
    %v218 = vsel %vm142, 1, 0
    %v219 = vsel %vm143, 1, 0
    %v220 = vsel %vm144, 1, 0
    %v221 = vsel %vm145, 1, 0
    %v222 = vsel %vm146, 1, 0
    %v223 = vsel %vm147, 1, 0
    %v224 = vsel %vm148, 1, 0
    %v225 = vsel %vm149, 1, 0
    %v226 = vsel %vm150, 1, 0
    %v227 = vsel %vm151, 1, 0
    %v228 = vsel %vm152, 1, 0
    %vm229 = vcmp.eq.s32.totalorder %v191, 1
    %vm230 = vcmp.eq.s32.totalorder %v192, 1
    %vm231 = vcmp.eq.s32.totalorder %v193, 1
    %vm232 = vcmp.eq.s32.totalorder %v194, 1
    %vm233 = vcmp.eq.s32.totalorder %v195, 1
    %vm234 = vcmp.eq.s32.totalorder %v196, 1
    %vm235 = vcmp.eq.s32.totalorder %v197, 1
    %vm236 = vcmp.eq.s32.totalorder %v198, 1
    %vm237 = vcmp.eq.s32.totalorder %v199, 1
    %vm238 = vcmp.eq.s32.totalorder %v200, 1
    %vm239 = vcmp.eq.s32.totalorder %v201, 1
    %vm240 = vcmp.eq.s32.totalorder %v202, 1
    %vm241 = vcmp.eq.s32.totalorder %v203, 1
    %vm242 = vcmp.eq.s32.totalorder %v204, 1
    %vm243 = vcmp.eq.s32.totalorder %v205, 1
    %vm244 = vcmp.eq.s32.totalorder %v206, 1
    %vm245 = vcmp.eq.s32.totalorder %v207, 1
    %vm246 = vcmp.eq.s32.totalorder %v208, 1
    %vm247 = vcmp.eq.s32.totalorder %v209, 1
    %vm248 = vcmp.eq.s32.totalorder %v210, 1
    %vm249 = vcmp.eq.s32.totalorder %v211, 1
    %vm250 = vcmp.eq.s32.totalorder %v212, 1
    %vm251 = vcmp.eq.s32.totalorder %v213, 1
    %vm252 = vcmp.eq.s32.totalorder %v214, 1
    %vm253 = vcmp.eq.s32.totalorder %v215, 1
    %vm254 = vcmp.eq.s32.totalorder %v216, 1
    %vm255 = vcmp.eq.s32.totalorder %v217, 1
    %vm256 = vcmp.eq.s32.totalorder %v218, 1
    %vm257 = vcmp.eq.s32.totalorder %v219, 1
    %vm258 = vcmp.eq.s32.totalorder %v220, 1
    %vm259 = vcmp.eq.s32.totalorder %v221, 1
    %vm260 = vcmp.eq.s32.totalorder %v222, 1
    %vm261 = vcmp.eq.s32.totalorder %v223, 1
    %vm262 = vcmp.eq.s32.totalorder %v224, 1
    %vm263 = vcmp.eq.s32.totalorder %v225, 1
    %vm264 = vcmp.eq.s32.totalorder %v226, 1
    %vm265 = vcmp.eq.s32.totalorder %v227, 1
    %vm266 = vcmp.eq.s32.totalorder %v228, 1
    %v267 = vsel %vm229, %v153, 0.0
    %v268 = vsel %vm230, %v154, 0.0
    %v269 = vsel %vm231, %v155, 0.0
    %v270 = vsel %vm232, %v156, 0.0
    %v271 = vsel %vm233, %v157, 0.0
    %v272 = vsel %vm234, %v158, 0.0
    %v273 = vsel %vm235, %v159, 0.0
    %v274 = vsel %vm236, %v160, 0.0
    %v275 = vsel %vm237, %v161, 0.0
    %v276 = vsel %vm238, %v162, 0.0
    %v277 = vsel %vm239, %v163, 0.0
    %v278 = vsel %vm240, %v164, 0.0
    %v279 = vsel %vm241, %v165, 0.0
    %v280 = vsel %vm242, %v166, 0.0
    %v281 = vsel %vm243, %v167, 0.0
    %v282 = vsel %vm244, %v168, 0.0
    %v283 = vsel %vm245, %v169, 0.0
    %v284 = vsel %vm246, %v170, 0.0
    %v285 = vsel %vm247, %v171, 0.0
    %v286 = vsel %vm248, %v172, 0.0
    %v287 = vsel %vm249, %v173, 0.0
    %v288 = vsel %vm250, %v174, 0.0
    %v289 = vsel %vm251, %v175, 0.0
    %v290 = vsel %vm252, %v176, 0.0
    %v291 = vsel %vm253, %v177, 0.0
    %v292 = vsel %vm254, %v178, 0.0
    %v293 = vsel %vm255, %v179, 0.0
    %v294 = vsel %vm256, %v180, 0.0
    %v295 = vsel %vm257, %v181, 0.0
    %v296 = vsel %vm258, %v182, 0.0
    %v297 = vsel %vm259, %v183, 0.0
    %v298 = vsel %vm260, %v184, 0.0
    %v299 = vsel %vm261, %v185, 0.0
    %v300 = vsel %vm262, %v186, 0.0
    %v301 = vsel %vm263, %v187, 0.0
    %v302 = vsel %vm264, %v188, 0.0
    %v303 = vsel %vm265, %v189, 0.0
    %v304 = vsel %vm266, %v190, 0.0
    %v305 = vcvt.s32.f32 %v191
    %v306 = vcvt.s32.f32 %v192
    %v307 = vcvt.s32.f32 %v193
    %v308 = vcvt.s32.f32 %v194
    %v309 = vcvt.s32.f32 %v195
    %v310 = vcvt.s32.f32 %v196
    %v311 = vcvt.s32.f32 %v197
    %v312 = vcvt.s32.f32 %v198
    %v313 = vcvt.s32.f32 %v199
    %v314 = vcvt.s32.f32 %v200
    %v315 = vcvt.s32.f32 %v201
    %v316 = vcvt.s32.f32 %v202
    %v317 = vcvt.s32.f32 %v203
    %v318 = vcvt.s32.f32 %v204
    %v319 = vcvt.s32.f32 %v205
    %v320 = vcvt.s32.f32 %v206
    %v321 = vcvt.s32.f32 %v207
    %v322 = vcvt.s32.f32 %v208
    %v323 = vcvt.s32.f32 %v209
    %v324 = vcvt.s32.f32 %v210
    %v325 = vcvt.s32.f32 %v211
    %v326 = vcvt.s32.f32 %v212
    %v327 = vcvt.s32.f32 %v213
    %v328 = vcvt.s32.f32 %v214
    %v329 = vcvt.s32.f32 %v215
    %v330 = vcvt.s32.f32 %v216
    %v331 = vcvt.s32.f32 %v217
    %v332 = vcvt.s32.f32 %v218
    %v333 = vcvt.s32.f32 %v219
    %v334 = vcvt.s32.f32 %v220
    %v335 = vcvt.s32.f32 %v221
    %v336 = vcvt.s32.f32 %v222
    %v337 = vcvt.s32.f32 %v223
    %v338 = vcvt.s32.f32 %v224
    %v339 = vcvt.s32.f32 %v225
    %v340 = vcvt.s32.f32 %v226
    %v341 = vcvt.s32.f32 %v227
    %v342 = vcvt.s32.f32 %v228
    %vm343 = vcmask 261120
    %v344 = vsel %vm343, %v267, %v305
    %v345 = vsel %vm343, %v268, %v306
    %v346 = vsel %vm343, %v269, %v307
    %v347 = vsel %vm343, %v270, %v308
    %v348 = vsel %vm343, %v271, %v309
    %v349 = vsel %vm343, %v272, %v310
    %v350 = vsel %vm343, %v273, %v311
    %v351 = vsel %vm343, %v274, %v312
    %v352 = vsel %vm343, %v275, %v313
    %v353 = vsel %vm343, %v276, %v314
    %v354 = vsel %vm343, %v277, %v315
    %v355 = vsel %vm343, %v278, %v316
    %v356 = vsel %vm343, %v279, %v317
    %v357 = vsel %vm343, %v280, %v318
    %v358 = vsel %vm343, %v281, %v319
    %v359 = vsel %vm343, %v282, %v320
    %v360 = vsel %vm343, %v283, %v321
    %v361 = vsel %vm343, %v284, %v322
    %v362 = vsel %vm343, %v285, %v323
    %v363 = vsel %vm343, %v286, %v324
    %v364 = vsel %vm343, %v287, %v325
    %v365 = vsel %vm343, %v288, %v326
    %v366 = vsel %vm343, %v289, %v327
    %v367 = vsel %vm343, %v290, %v328
    %v368 = vsel %vm343, %v291, %v329
    %v369 = vsel %vm343, %v292, %v330
    %v370 = vsel %vm343, %v293, %v331
    %v371 = vsel %vm343, %v294, %v332
    %v372 = vsel %vm343, %v295, %v333
    %v373 = vsel %vm343, %v296, %v334
    %v374 = vsel %vm343, %v297, %v335
    %v375 = vsel %vm343, %v298, %v336
    %v376 = vsel %vm343, %v299, %v337
    %v377 = vsel %vm343, %v300, %v338
    %v378 = vsel %vm343, %v301, %v339
    %v379 = vsel %vm343, %v302, %v340
    %v380 = vsel %vm343, %v303, %v341
    %v381 = vsel %vm343, %v304, %v342
    %v382 = vld [vmem:[%s1] sm:$0x7]
    %v383 = vlaneseq
    %v384 = vshrl.u32 %v383, 7
    %v385 = vsub.s32 0, %v384
    %v386 = vrot.slane %v382, %v385
    %v387 = vlaneseq
    %v388 = vshrl.u32 %v387, 7
    %v389 = vsub.s32 1, %v388
    %v390 = vrot.slane %v382, %v389
    %v391 = vlaneseq
    %v392 = vshrl.u32 %v391, 7
    %v393 = vsub.s32 2, %v392
    %v394 = vrot.slane %v382, %v393
    %vm395 = vcmp.eq.s32.totalorder %v38, %v386
    %vm396 = vcmp.eq.s32.totalorder %v38, %v390
    %vm397 = vcmp.eq.s32.totalorder %v38, %v394
    %v398 = vsel %vm395, 1, 0
    %v399 = vsel %vm396, 1, 0
    %v400 = vsel %vm397, 1, 0
    %v401 = vcvt.s32.f32 %v398
    %v402 = vcvt.s32.f32 %v399
    %v403 = vcvt.s32.f32 %v400
    %v404 = vld [vmem:[#allocation2] sm:$0xff]
    %vm405 = vcmask 359424
    %v407 = vsel %vm405, %v403, 0
    %vm409 = vcmask 1043456
    %v411 = vsel %vm409, %v381, 0
    %413 = vmatprep.subr.mxu0 0.0
    %414 = vmatpush1.msra.mxu0 %v344
    %415 = vmatprep.subr.mxu0 0.0
    %416 = vmatpush1.msra.mxu0 %v345
    %417 = vmatprep.subr.mxu0 0.0
    %418 = vmatpush1.msra.mxu0 %v346
    %419 = vmatprep.subr.mxu0 0.0
    %420 = vmatpush1.msra.mxu0 %v347
    %421 = vmatprep.subr.mxu0 0.0
    %422 = vmatpush1.msra.mxu0 %v348
    %423 = vmatprep.subr.mxu0 0.0
    %424 = vmatpush1.msra.mxu0 %v349
    %425 = vmatprep.subr.mxu0 0.0
    %426 = vmatpush1.msra.mxu0 %v350
    %427 = vmatprep.subr.mxu0 0.0
    %428 = vmatpush1.msra.mxu0 %v351
    %429 = vmatprep.subr.mxu0 0.0
    %430 = vmatpush1.msra.mxu0 %v352
    %431 = vmatprep.subr.mxu0 0.0
    %432 = vmatpush1.msra.mxu0 %v353
    %433 = vmatprep.subr.mxu0 0.0
    %434 = vmatpush1.msra.mxu0 %v354
    %435 = vmatprep.subr.mxu0 0.0
    %436 = vmatpush1.msra.mxu0 %v355
    %437 = vmatprep.subr.mxu0 0.0
    %438 = vmatpush1.msra.mxu0 %v356
    %439 = vmatprep.subr.mxu0 0.0
    %440 = vmatpush1.msra.mxu0 %v357
    %441 = vmatprep.subr.mxu0 0.0
    %442 = vmatpush1.msra.mxu0 %v358
    %443 = vmatprep.subr.mxu0 0.0
    %444 = vmatpush1.msra.mxu0 %v359
    %445 = vmatprep.subr.mxu0 0.0
    %446 = vmatpush1.msra.mxu0 %v360
    %447 = vmatprep.subr.mxu0 0.0
    %448 = vmatpush1.msra.mxu0 %v361
    %449 = vmatprep.subr.mxu0 0.0
    %450 = vmatpush1.msra.mxu0 %v362
    %451 = vmatprep.subr.mxu0 0.0
    %452 = vmatpush1.msra.mxu0 %v363
    %453 = vmatprep.subr.mxu0 0.0
    %454 = vmatpush1.msra.mxu0 %v364
    %455 = vmatprep.subr.mxu0 0.0
    %456 = vmatpush1.msra.mxu0 %v365
    %457 = vmatprep.subr.mxu0 0.0
    %458 = vmatpush1.msra.mxu0 %v366
    %459 = vmatprep.subr.mxu0 0.0
    %460 = vmatpush1.msra.mxu0 %v367
    %461 = vmatprep.subr.mxu0 0.0
    %462 = vmatpush1.msra.mxu0 %v368
    %463 = vmatprep.subr.mxu0 0.0
    %464 = vmatpush1.msra.mxu0 %v369
    %465 = vmatprep.subr.mxu0 0.0
    %466 = vmatpush1.msra.mxu0 %v370
    %467 = vmatprep.subr.mxu0 0.0
    %468 = vmatpush1.msra.mxu0 %v371
    %469 = vmatprep.subr.mxu0 0.0
    %470 = vmatpush1.msra.mxu0 %v372
    %471 = vmatprep.subr.mxu0 0.0
    %472 = vmatpush1.msra.mxu0 %v373
    %473 = vmatprep.subr.mxu0 0.0
    %474 = vmatpush1.msra.mxu0 %v374
    %475 = vmatprep.subr.mxu0 0.0
    %476 = vmatpush1.msra.mxu0 %v375
    %477 = vmatprep.mubr.f32.mxu0 %v402
    %478 = vmatmul.mubr.f32.gmra.mrb[0].mxu0 %v401
    %v479 = vpop.f32.mrb[0].mxu0
    %v480 = vadd.f32 0.0, %v479
    %v481 = vpop.f32.mrb[0].mxu0
    %482 = vdwg.mxu0
    %483 = vmatprep.subr.mxu0 0.0
    %484 = vmatpush1.msra.mxu0 %v376
    %485 = vmatprep.subr.mxu0 0.0
    %486 = vmatpush1.msra.mxu0 %v377
    %487 = vmatprep.subr.mxu0 0.0
    %488 = vmatpush1.msra.mxu0 %v378
    %489 = vmatprep.subr.mxu0 0.0
    %490 = vmatpush1.msra.mxu0 %v379
    %491 = vmatprep.subr.mxu0 0.0
    %492 = vmatpush1.msra.mxu0 %v380
    %493 = vmatprep.subr.mxu0 0.0
    %494 = vmatpush1.msra.mxu0 %v411
    %495 = vmatprep.subr.mxu0 0.0
    %496 = vmatpush1.msra.mxu0 0.0
    %497 = vmatprep.subr.mxu0 0.0
    %498 = vmatpush1.msra.mxu0 0.0
    %499 = vmatprep.subr.mxu0 0.0
    %500 = vmatpush1.msra.mxu0 0.0
    %501 = vmatprep.subr.mxu0 0.0
    %502 = vmatpush1.msra.mxu0 0.0
    %503 = vmatprep.subr.mxu0 0.0
    %504 = vmatpush1.msra.mxu0 0.0
    %505 = vmatprep.subr.mxu0 0.0
    %506 = vmatpush1.msra.mxu0 0.0
    %507 = vmatprep.subr.mxu0 0.0
    %508 = vmatpush1.msra.mxu0 0.0
    %509 = vmatprep.subr.mxu0 0.0
    %510 = vmatpush1.msra.mxu0 0.0
    %511 = vmatprep.subr.mxu0 0.0
    %512 = vmatpush1.msra.mxu0 0.0
    %513 = vmatprep.subr.mxu0 0.0
    %514 = vmatpush1.msra.mxu0 0.0
    %515 = vmatprep.subr.mxu0 0.0
    %516 = vmatpush1.msra.mxu0 0.0
    %517 = vmatprep.subr.mxu0 0.0
    %518 = vmatpush1.msra.mxu0 0.0
    %519 = vmatprep.subr.mxu0 0.0
    %520 = vmatpush1.msra.mxu0 0.0
    %521 = vmatprep.subr.mxu0 0.0
    %522 = vmatpush1.msra.mxu0 0.0
    %523 = vmatprep.subr.mxu0 0.0
    %524 = vmatpush1.msra.mxu0 0.0
    %525 = vmatprep.subr.mxu0 0.0
    %526 = vmatpush1.msra.mxu0 0.0
    %527 = vmatprep.subr.mxu0 0.0
    %528 = vmatpush1.msra.mxu0 0.0
    %529 = vmatprep.subr.mxu0 0.0
    %530 = vmatpush1.msra.mxu0 0.0
    %531 = vmatprep.subr.mxu0 0.0
    %532 = vmatpush1.msra.mxu0 0.0
    %533 = vmatprep.subr.mxu0 0.0
    %534 = vmatpush1.msra.mxu0 0.0
    %535 = vmatprep.subr.mxu0 0.0
    %536 = vmatpush1.msra.mxu0 0.0
    %537 = vmatprep.subr.mxu0 0.0
    %538 = vmatpush1.msra.mxu0 0.0
    %539 = vmatprep.subr.mxu0 0.0
    %540 = vmatpush1.msra.mxu0 0.0
    %541 = vmatprep.subr.mxu0 0.0
    %542 = vmatpush1.msra.mxu0 0.0
    %543 = vmatprep.subr.mxu0 0.0
    %544 = vmatpush1.msra.mxu0 0.0
    %545 = vmatprep.subr.mxu0 0.0
    %546 = vmatpush1.msra.mxu0 0.0
    %547 = vmatprep.mubr.f32.mxu0 0.0
    %548 = vmatmul.mubr.f32.gmra.mrb[0].mxu0 %v407
    %v549 = vpop.f32.mrb[0].mxu0
    %v550 = vadd.f32 %v480, %v549
    %v551 = vpop.f32.mrb[0].mxu0
    %552 = vdwg.mxu0
    %v553 = vadd.f32 %v404, %v550
    %vm554 = vcmask 269312
    %555 = vst.msk [vmem:[#allocation2] sm:$0xff] %vm554, %v553
    // Predicated region
    $region38: #{tpu_custom_call.1} parent=1 // pred_check
      %p556 = pneg %p30
    $region39: #{tpu_custom_call.1} parent=1 // pred_check_branch
      %558 = sbr.rel (%p556) target = $region41
    $region40: #{tpu_custom_call.1} parent=1 // pred_region
      %v559 = vld [vmem:[#allocation2] sm:$0xff]
      %v560 = vmax.f32 %v559, 1.0
      %v561 = vrcp.pop %v560
      %563 = vset.pattern.permute.xlu0 32
      %564 = vperm.xlu0 %563, %v561
      %v565 = vpop.permute.xlu0 %564
      %v567 = vmul.f32 %v559, %v565
      %v568 = vld [vmem:[%s2] sm:$0xff]
      %v569 = vld [vmem:[%s2 + $0x8] sm:$0xff]
      %v570 = vld [vmem:[%s2 + $0x10] sm:$0xff]
      %v571 = vld [vmem:[%s2 + $0x18] sm:$0xff]
      %v572 = vld [vmem:[%s3] sm:$0x1]
      %v574 = vlaneseq
      %v575 = vshrl.u32 %v574, 7
      %v576 = vsub.s32 0, %v575
      %v577 = vrot.slane %v572, %v576
      %v580 = vsel %vm343, %v567, 0
      %582 = vmatprep.subr.mxu0 0.0
      %583 = vmatpush1.msra.mxu0 %v568
      %584 = vmatprep.subr.mxu0 0.0
      %585 = vmatpush1.msra.mxu0 %v569
      %586 = vmatprep.subr.mxu0 0.0
      %587 = vmatpush1.msra.mxu0 %v570
      %588 = vmatprep.subr.mxu0 0.0
      %589 = vmatpush1.msra.mxu0 %v571
      %590 = vmatprep.subr.mxu0 0.0
      %591 = vmatpush1.msra.mxu0 0.0
      %592 = vmatprep.subr.mxu0 0.0
      %593 = vmatpush1.msra.mxu0 0.0
      %594 = vmatprep.subr.mxu0 0.0
      %595 = vmatpush1.msra.mxu0 0.0
      %596 = vmatprep.subr.mxu0 0.0
      %597 = vmatpush1.msra.mxu0 0.0
      %598 = vmatprep.subr.mxu0 0.0
      %599 = vmatpush1.msra.mxu0 0.0
      %600 = vmatprep.subr.mxu0 0.0
      %601 = vmatpush1.msra.mxu0 0.0
      %602 = vmatprep.subr.mxu0 0.0
      %603 = vmatpush1.msra.mxu0 0.0
      %604 = vmatprep.subr.mxu0 0.0
      %605 = vmatpush1.msra.mxu0 0.0
      %606 = vmatprep.subr.mxu0 0.0
      %607 = vmatpush1.msra.mxu0 0.0
      %608 = vmatprep.subr.mxu0 0.0
      %609 = vmatpush1.msra.mxu0 0.0
      %610 = vmatprep.subr.mxu0 0.0
      %611 = vmatpush1.msra.mxu0 0.0
      %612 = vmatprep.subr.mxu0 0.0
      %613 = vmatpush1.msra.mxu0 0.0
      %614 = vmatprep.subr.mxu0 0.0
      %615 = vmatpush1.msra.mxu0 0.0
      %616 = vmatprep.subr.mxu0 0.0
      %617 = vmatpush1.msra.mxu0 0.0
      %618 = vmatprep.subr.mxu0 0.0
      %619 = vmatpush1.msra.mxu0 0.0
      %620 = vmatprep.subr.mxu0 0.0
      %621 = vmatpush1.msra.mxu0 0.0
      %622 = vmatprep.subr.mxu0 0.0
      %623 = vmatpush1.msra.mxu0 0.0
      %624 = vmatprep.subr.mxu0 0.0
      %625 = vmatpush1.msra.mxu0 0.0
      %626 = vmatprep.subr.mxu0 0.0
      %627 = vmatpush1.msra.mxu0 0.0
      %628 = vmatprep.subr.mxu0 0.0
      %629 = vmatpush1.msra.mxu0 0.0
      %630 = vmatprep.subr.mxu0 0.0
      %631 = vmatpush1.msra.mxu0 0.0
      %632 = vmatprep.subr.mxu0 0.0
      %633 = vmatpush1.msra.mxu0 0.0
      %634 = vmatprep.subr.mxu0 0.0
      %635 = vmatpush1.msra.mxu0 0.0
      %636 = vmatprep.subr.mxu0 0.0
      %637 = vmatpush1.msra.mxu0 0.0
      %638 = vmatprep.subr.mxu0 0.0
      %639 = vmatpush1.msra.mxu0 0.0
      %640 = vmatprep.subr.mxu0 0.0
      %641 = vmatpush1.msra.mxu0 0.0
      %642 = vmatprep.subr.mxu0 0.0
      %643 = vmatpush1.msra.mxu0 0.0
      %644 = vmatprep.subr.mxu0 0.0
      %645 = vmatpush1.msra.mxu0 0.0
      %646 = vmatprep.mubr.f32.mxu0 0.0
      %647 = vmatmul.mubr.f32.gmra.mrb[0].mxu0 %v580
      %v648 = vpop.f32.mrb[0].mxu0
      %v649 = vadd.f32 %v577, %v648
      %v650 = vpop.f32.mrb[0].mxu0
      %651 = vdwg.mxu0
      %v652 = vmax.f32 %v649, 0.0
      %v653 = vld [vmem:[%s4] sm:$0xff]
      %v654 = vld [vmem:[%s4 + $0x8] sm:$0xff]
      %v655 = vld [vmem:[%s5] sm:$0x1]
      %v657 = vlaneseq
      %v658 = vshrl.u32 %v657, 7
      %v659 = vsub.s32 0, %v658
      %v660 = vrot.slane %v655, %v659
      %vm662 = vcmask 130048
      %v664 = vsel %vm662, %v652, 0
      %666 = vmatprep.subr.mxu0 0.0
      %667 = vmatpush1.msra.mxu0 %v653
      %668 = vmatprep.subr.mxu0 0.0
      %669 = vmatpush1.msra.mxu0 %v654
      %670 = vmatprep.subr.mxu0 0.0
      %671 = vmatpush1.msra.mxu0 0.0
      %672 = vmatprep.subr.mxu0 0.0
      %673 = vmatpush1.msra.mxu0 0.0
      %674 = vmatprep.subr.mxu0 0.0
      %675 = vmatpush1.msra.mxu0 0.0
      %676 = vmatprep.subr.mxu0 0.0
      %677 = vmatpush1.msra.mxu0 0.0
      %678 = vmatprep.subr.mxu0 0.0
      %679 = vmatpush1.msra.mxu0 0.0
      %680 = vmatprep.subr.mxu0 0.0
      %681 = vmatpush1.msra.mxu0 0.0
      %682 = vmatprep.subr.mxu0 0.0
      %683 = vmatpush1.msra.mxu0 0.0
      %684 = vmatprep.subr.mxu0 0.0
      %685 = vmatpush1.msra.mxu0 0.0
      %686 = vmatprep.subr.mxu0 0.0
      %687 = vmatpush1.msra.mxu0 0.0
      %688 = vmatprep.subr.mxu0 0.0
      %689 = vmatpush1.msra.mxu0 0.0
      %690 = vmatprep.subr.mxu0 0.0
      %691 = vmatpush1.msra.mxu0 0.0
      %692 = vmatprep.subr.mxu0 0.0
      %693 = vmatpush1.msra.mxu0 0.0
      %694 = vmatprep.subr.mxu0 0.0
      %695 = vmatpush1.msra.mxu0 0.0
      %696 = vmatprep.subr.mxu0 0.0
      %697 = vmatpush1.msra.mxu0 0.0
      %698 = vmatprep.subr.mxu0 0.0
      %699 = vmatpush1.msra.mxu0 0.0
      %700 = vmatprep.subr.mxu0 0.0
      %701 = vmatpush1.msra.mxu0 0.0
      %702 = vmatprep.subr.mxu0 0.0
      %703 = vmatpush1.msra.mxu0 0.0
      %704 = vmatprep.subr.mxu0 0.0
      %705 = vmatpush1.msra.mxu0 0.0
      %706 = vmatprep.subr.mxu0 0.0
      %707 = vmatpush1.msra.mxu0 0.0
      %708 = vmatprep.subr.mxu0 0.0
      %709 = vmatpush1.msra.mxu0 0.0
      %710 = vmatprep.subr.mxu0 0.0
      %711 = vmatpush1.msra.mxu0 0.0
      %712 = vmatprep.subr.mxu0 0.0
      %713 = vmatpush1.msra.mxu0 0.0
      %714 = vmatprep.subr.mxu0 0.0
      %715 = vmatpush1.msra.mxu0 0.0
      %716 = vmatprep.subr.mxu0 0.0
      %717 = vmatpush1.msra.mxu0 0.0
      %718 = vmatprep.subr.mxu0 0.0
      %719 = vmatpush1.msra.mxu0 0.0
      %720 = vmatprep.subr.mxu0 0.0
      %721 = vmatpush1.msra.mxu0 0.0
      %722 = vmatprep.subr.mxu0 0.0
      %723 = vmatpush1.msra.mxu0 0.0
      %724 = vmatprep.subr.mxu0 0.0
      %725 = vmatpush1.msra.mxu0 0.0
      %726 = vmatprep.subr.mxu0 0.0
      %727 = vmatpush1.msra.mxu0 0.0
      %728 = vmatprep.subr.mxu0 0.0
      %729 = vmatpush1.msra.mxu0 0.0
      %730 = vmatprep.mubr.f32.mxu0 0.0
      %731 = vmatmul.mubr.f32.gmra.mrb[0].mxu0 %v664
      %v732 = vpop.f32.mrb[0].mxu0
      %v733 = vadd.f32 %v660, %v732
      %v734 = vpop.f32.mrb[0].mxu0
      %735 = vdwg.mxu0
      %v736 = vmax.f32 %v733, 0.0
      %v737 = vld [vmem:[%s6] sm:$0xff]
      %v738 = vld [vmem:[%s7] sm:$0x1]
      %v740 = vlaneseq
      %v741 = vshrl.u32 %v740, 7
      %v742 = vsub.s32 0, %v741
      %v743 = vrot.slane %v738, %v742
      %vm745 = vcmask 64512
      %v747 = vsel %vm745, %v736, 0
      %749 = vmatprep.subr.mxu0 0.0
      %750 = vmatpush1.msra.mxu0 %v737
      %751 = vmatprep.subr.mxu0 0.0
      %752 = vmatpush1.msra.mxu0 0.0
      %753 = vmatprep.subr.mxu0 0.0
      %754 = vmatpush1.msra.mxu0 0.0
      %755 = vmatprep.subr.mxu0 0.0
      %756 = vmatpush1.msra.mxu0 0.0
      %757 = vmatprep.subr.mxu0 0.0
      %758 = vmatpush1.msra.mxu0 0.0
      %759 = vmatprep.subr.mxu0 0.0
      %760 = vmatpush1.msra.mxu0 0.0
      %761 = vmatprep.subr.mxu0 0.0
      %762 = vmatpush1.msra.mxu0 0.0
      %763 = vmatprep.subr.mxu0 0.0
      %764 = vmatpush1.msra.mxu0 0.0
      %765 = vmatprep.subr.mxu0 0.0
      %766 = vmatpush1.msra.mxu0 0.0
      %767 = vmatprep.subr.mxu0 0.0
      %768 = vmatpush1.msra.mxu0 0.0
      %769 = vmatprep.subr.mxu0 0.0
      %770 = vmatpush1.msra.mxu0 0.0
      %771 = vmatprep.subr.mxu0 0.0
      %772 = vmatpush1.msra.mxu0 0.0
      %773 = vmatprep.subr.mxu0 0.0
      %774 = vmatpush1.msra.mxu0 0.0
      %775 = vmatprep.subr.mxu0 0.0
      %776 = vmatpush1.msra.mxu0 0.0
      %777 = vmatprep.subr.mxu0 0.0
      %778 = vmatpush1.msra.mxu0 0.0
      %779 = vmatprep.subr.mxu0 0.0
      %780 = vmatpush1.msra.mxu0 0.0
      %781 = vmatprep.subr.mxu0 0.0
      %782 = vmatpush1.msra.mxu0 0.0
      %783 = vmatprep.subr.mxu0 0.0
      %784 = vmatpush1.msra.mxu0 0.0
      %785 = vmatprep.subr.mxu0 0.0
      %786 = vmatpush1.msra.mxu0 0.0
      %787 = vmatprep.subr.mxu0 0.0
      %788 = vmatpush1.msra.mxu0 0.0
      %789 = vmatprep.subr.mxu0 0.0
      %790 = vmatpush1.msra.mxu0 0.0
      %791 = vmatprep.subr.mxu0 0.0
      %792 = vmatpush1.msra.mxu0 0.0
      %793 = vmatprep.subr.mxu0 0.0
      %794 = vmatpush1.msra.mxu0 0.0
      %795 = vmatprep.subr.mxu0 0.0
      %796 = vmatpush1.msra.mxu0 0.0
      %797 = vmatprep.subr.mxu0 0.0
      %798 = vmatpush1.msra.mxu0 0.0
      %799 = vmatprep.subr.mxu0 0.0
      %800 = vmatpush1.msra.mxu0 0.0
      %801 = vmatprep.subr.mxu0 0.0
      %802 = vmatpush1.msra.mxu0 0.0
      %803 = vmatprep.subr.mxu0 0.0
      %804 = vmatpush1.msra.mxu0 0.0
      %805 = vmatprep.subr.mxu0 0.0
      %806 = vmatpush1.msra.mxu0 0.0
      %807 = vmatprep.subr.mxu0 0.0
      %808 = vmatpush1.msra.mxu0 0.0
      %809 = vmatprep.subr.mxu0 0.0
      %810 = vmatpush1.msra.mxu0 0.0
      %811 = vmatprep.subr.mxu0 0.0
      %812 = vmatpush1.msra.mxu0 0.0
      %813 = vmatprep.mubr.f32.mxu0 0.0
      %814 = vmatmul.mubr.f32.gmra.mrb[0].mxu0 %v747
      %v815 = vpop.f32.mrb[0].mxu0
      %v816 = vadd.f32 %v743, %v815
      %v817 = vpop.f32.mrb[0].mxu0
      %818 = vdwg.mxu0
      %819 = vst [vmem:[#allocation3] sm:$0xff] %v816
    $region41: #{tpu_custom_call.1} parent=1 // pred_fallthru
      _
    // Predicated region
    $region42: #{tpu_custom_call.1} parent=1 // pred_check
      _
    $region43: #{tpu_custom_call.1} parent=1 // pred_check_branch
      %821 = sbr.rel (0) target = $region45
    $region44: #{tpu_custom_call.1} parent=1 // pred_region
      %s823 = ssub.s32 128, 128
      %824 = vsyncadd [#allocation4], %s823
      %s826 = sshll.u32 [#allocation3], 4
      %s827 = int_to_ptr.vmem [resolvable:$true] %s826
      %829 = dma.vmem_to_hbm [thread:$0]  %s827, 128, %s8, [#allocation4]
    $region45: #{tpu_custom_call.1} parent=1 // pred_fallthru
      _
    // Predicated region
    $region46: #{tpu_custom_call.1} parent=1 // pred_check
      _
    $region47: #{tpu_custom_call.1} parent=1 // pred_check_branch
      %831 = sbr.rel (0) target = $region49
    $region48: #{tpu_custom_call.1} parent=1 // pred_region
      %832 = dma.done [#allocation4], 128
    $region49: #{tpu_custom_call.1} parent=1 // pred_fallthru
      _
    %833 = vsyncpa [#allocation4], 1

</llo_original>
